<compile_context>
chip_gen: v5e
topology: v5e:2x2
jax: 0.10.0
libtpu: 0.0.40
codegen_flags: <defaults>
</compile_context>

<pallas_src>
import functools

import jax
import jax.numpy as jnp
from jax.experimental import pallas as pl
from jax.experimental.pallas import tpu as pltpu


def _round_up(a, b):
    return ((a + b - 1) // b) * b


# ----------------------------- kernels --------------------------------------


def _mxu_kernel(x_ref, w_ref, o_ref):
    # x: (C_in, TM), w: (C_out, C_in) -> o: (C_out, TM); f32 accumulation.
    o_ref[...] = jnp.dot(
        w_ref[...], x_ref[...], preferred_element_type=jnp.float32
    ).astype(o_ref.dtype)


def _mxu_add_kernel(x_ref, w_ref, td_ref, o_ref):
    # Fused FPN top-down add: lateral(x) + upsampled coarser map.
    acc = jnp.dot(w_ref[...], x_ref[...], preferred_element_type=jnp.float32)
    o_ref[...] = (acc + td_ref[...].astype(jnp.float32)).astype(o_ref.dtype)


def _vpu_compute(x_ref, w_ref):
    # Tiny-channel path: C_in/C_out are too small to be worth an MXU pass.
    # Weight lives in SMEM; each term is a scalar x vector multiply-add on the
    # VPU (no per-term lane broadcasts).  Loops are statically unrolled.
    x = x_ref[...].astype(jnp.float32)            # (C_in, TM)
    c_in = x.shape[0]
    c_out = w_ref.shape[0]
    rows = []
    for o in range(c_out):
        acc = w_ref[o, 0] * x[0:1, :]             # (1, TM)
        for c in range(1, c_in):
            acc = acc + w_ref[o, c] * x[c:c + 1, :]
        rows.append(acc)
    return jnp.concatenate(rows, axis=0)          # (C_out, TM)


def _vpu_kernel(x_ref, w_ref, o_ref):
    o_ref[...] = _vpu_compute(x_ref, w_ref).astype(o_ref.dtype)


def _vpu_add_kernel(x_ref, w_ref, td_ref, o_ref):
    acc = _vpu_compute(x_ref, w_ref) + td_ref[...].astype(jnp.float32)
    o_ref[...] = acc.astype(o_ref.dtype)


# ----------------------------- wrapper ---------------------------------------


@functools.partial(
    jax.jit, static_argnames=("tile_hw", "mxu_min_cin", "use_bf16_mxu"))
def conv1x1(x_nchw, weight, topdown=None, tile_hw=2048, mxu_min_cin=8,
            use_bf16_mxu=True):
    """1x1 convolution, no bias (the FPN `lateral*` blocks).

    x_nchw:  (N, C_in, H, W)
    weight:  (C_out, C_in, 1, 1)    (PyTorch nn.Conv2d weight layout)
    topdown: optional (N, C_out, H, W) map to add in the epilogue
             (fuses the FPN `lateral + interpolate(coarser)` add).
    returns  (N, C_out, H, W) in x_nchw.dtype
    """
    N, C_in, H, W = x_nchw.shape
    C_out = weight.shape[0]
    M = H * W
    out_dtype = x_nchw.dtype

    # NCHW -> (N, C_in, M): pure reshape (pixels land on the 128-lane axis).
    x_flat = x_nchw.reshape(N, C_in, M)
    w2d = weight.reshape(C_out, C_in)
    td_flat = None if topdown is None else topdown.reshape(N, C_out, M)

    use_mxu = C_in >= mxu_min_cin
    if use_mxu and use_bf16_mxu:
        # Memory-bound at real FPN widths: bf16 I/O halves HBM read traffic
        # and uses the native-bf16 MXU; accumulation stays f32.
        x_flat = x_flat.astype(jnp.bfloat16)
        w2d = w2d.astype(jnp.bfloat16)

    in_item = jnp.dtype(x_flat.dtype).itemsize
    w_item = jnp.dtype(w2d.dtype).itemsize
    out_item = jnp.dtype(out_dtype).itemsize
    td_item = 0 if td_flat is None else jnp.dtype(td_flat.dtype).itemsize

    # VMEM-budget-aware lane-dense pixel tile (multiple of 128).
    # ~14 MiB fits v5e's 16 MiB default scoped VMEM; v6e/v7x have headroom.
    budget = 14 * 1024 * 1024 - 2 * C_out * C_in * w_item
    bytes_per_col = 2 * (C_in * in_item + C_out * (out_item + td_item))  # 2x: double-buffered
    tile_cap = max(128, (budget // bytes_per_col) // 128 * 128)
    tile = max(128, min((tile_hw // 128) * 128, tile_cap, _round_up(M, 128)))
    num_m_tiles = pl.cdiv(M, tile)   # ragged tail handled by Pallas masking

    x_spec = pl.BlockSpec((None, C_in, tile), lambda j, n: (n, 0, j))
    o_spec = pl.BlockSpec((None, C_out, tile), lambda j, n: (n, 0, j))

    if use_mxu:
        w_spec = pl.BlockSpec((C_out, C_in), lambda j, n: (0, 0))
        kernel = _mxu_kernel if td_flat is None else _mxu_add_kernel
    else:
        # Tiny weight read as scalars from SMEM.
        w_spec = pl.BlockSpec(memory_space=pltpu.MemorySpace.SMEM)
        kernel = _vpu_kernel if td_flat is None else _vpu_add_kernel

    in_specs = [x_spec, w_spec]
    args = [x_flat, w2d]
    if td_flat is not None:
        in_specs.append(
            pl.BlockSpec((None, C_out, tile), lambda j, n: (n, 0, j)))
        args.append(td_flat)

    cost = pl.CostEstimate(
        flops=2 * N * M * C_in * C_out,
        transcendentals=0,
        bytes_accessed=(N * C_in * M * in_item
                        + C_out * C_in * w_item
                        + N * C_out * M * (out_item + td_item)),
    )

    out_flat = pl.pallas_call(
        kernel,
        out_shape=jax.ShapeDtypeStruct((N, C_out, M), out_dtype),
        grid_spec=pltpu.PrefetchScalarGridSpec(
            num_scalar_prefetch=0,
            # Pixel-tile axis first: the large, even parallel axis is the one
            # split across TensorCores (v7x megacore) even when N == 1.
            grid=(num_m_tiles, N),
            in_specs=in_specs,
            out_specs=o_spec,
        ),
        compiler_params=pltpu.CompilerParams(
            dimension_semantics=("parallel", "parallel"),
        ),
        cost_estimate=cost,
    )(*args)

    # (N, C_out, M) -> (N, C_out, H, W): pure reshape.
    return out_flat.reshape(N, C_out, H, W)


if __name__ == "__main__":
    key = jax.random.PRNGKey(0)
    kx, kw, kx2, kw2, kx3, kw3, ktd = jax.random.split(key, 7)

    def ref_conv1x1(x, w, td=None):
        out = jnp.einsum("oc,nchw->nohw", w[:, :, 0, 0], x,
                         precision=jax.lax.Precision.HIGHEST)
        return out if td is None else out + td

    # 1) Tiny channels (VPU / SMEM-scalar path), aligned spatial size.
    N, C_in, C_out, H, W = 2, 4, 8, 16, 16
    x = jax.random.normal(kx, (N, C_in, H, W), dtype=jnp.float32)
    bound = 1.0 / (C_in ** 0.5)
    weight = jax.random.uniform(
        kw, (C_out, C_in, 1, 1), minval=-bound, maxval=bound, dtype=jnp.float32)
    out = jax.block_until_ready(conv1x1(x, weight))
    assert out.shape == (N, C_out, H, W)
    assert jnp.allclose(out, ref_conv1x1(x, weight), atol=1e-4, rtol=1e-4)

    # 2) Ragged H*W (M = 120 < 128): single partial block; exercises the
    #    Pallas ragged-tail masking that replaced the old pad/slice copies.
    x2 = jax.random.normal(kx2, (1, 4, 10, 12), dtype=jnp.float32)
    w2 = jax.random.uniform(
        kw2, (8, 4, 1, 1), minval=-bound, maxval=bound, dtype=jnp.float32)
    out2 = jax.block_until_ready(conv1x1(x2, w2))
    assert out2.shape == (1, 8, 10, 12)
    assert jnp.allclose(out2, ref_conv1x1(x2, w2), atol=1e-4, rtol=1e-4)

    # 3) Wider channels (MXU path, bf16 I/O + f32 accumulation) with the fused
    #    FPN top-down add (lateral + upsampled coarser map).
    x3 = jax.random.normal(kx3, (1, 64, 16, 16), dtype=jnp.float32)
    w3 = jax.random.normal(kw3, (128, 64, 1, 1), dtype=jnp.float32) * 0.125
    td3 = jax.random.normal(ktd, (1, 128, 16, 16), dtype=jnp.float32)
    out3 = jax.block_until_ready(conv1x1(x3, w3, td3))
    assert out3.shape == (1, 128, 16, 16)
    # bf16 inputs loosen tolerance vs the f32 reference (expected ~1e-2).
    assert jnp.allclose(out3, ref_conv1x1(x3, w3, td3), atol=3e-2, rtol=3e-2)

    # 3b) Same MXU path without the fused add (the standalone lateral4 case).
    out3b = jax.block_until_ready(conv1x1(x3, w3))
    assert jnp.allclose(out3b, ref_conv1x1(x3, w3), atol=3e-2, rtol=3e-2)

    print("KERNEL_OK")
</pallas_src>

<mosaic_0001>
module attributes {stable_mosaic.version = 11 : i64} {
  func.func @_vpu_kernel(%arg0: i32, %arg1: i32, %arg2: memref<1x4x256xf32, #tpu.memory_space<vmem>>, %arg3: memref<8x4xf32, #tpu.memory_space<smem>>, %arg4: memref<1x8x256xf32, #tpu.memory_space<vmem>>) attributes {dimension_semantics = [#tpu.dimension_semantics<parallel>, #tpu.dimension_semantics<parallel>], iteration_bounds = array<i64: 1, 2>, scalar_prefetch = 0 : i64, scratch_operands = 0 : i64, tpu.core_type = #tpu.core_type<tc>, window_params = [{transform_indices = @transform_0, window_bounds = array<i64: 1, 4, 256>}, {transform_indices = @transform_1, window_bounds = array<i64: 8, 4>}, {transform_indices = @transform_2, window_bounds = array<i64: 1, 8, 256>}]} {
    %c0 = arith.constant 0 : index
    %c0_0 = arith.constant 0 : index
    %c0_1 = arith.constant 0 : index
    %0 = vector.load %arg2[%c0, %c0_0, %c0_1] : memref<1x4x256xf32, #tpu.memory_space<vmem>>, vector<1x4x256xf32>
    %1 = vector.shape_cast %0 : vector<1x4x256xf32> to vector<4x256xf32>
    %c0_2 = arith.constant 0 : index
    %c0_3 = arith.constant 0 : index
    %2 = memref.load %arg3[%c0_2, %c0_3] : memref<8x4xf32, #tpu.memory_space<smem>>
    %3 = vector.extract_strided_slice %1 {offsets = [0, 0], sizes = [1, 256], strides = [1, 1]} : vector<4x256xf32> to vector<1x256xf32>
    %4 = vector.broadcast %2 : f32 to vector<1x256xf32>
    %5 = arith.mulf %4, %3 : vector<1x256xf32>
    %c0_4 = arith.constant 0 : index
    %c1 = arith.constant 1 : index
    %6 = memref.load %arg3[%c0_4, %c1] : memref<8x4xf32, #tpu.memory_space<smem>>
    %7 = vector.extract_strided_slice %1 {offsets = [1, 0], sizes = [1, 256], strides = [1, 1]} : vector<4x256xf32> to vector<1x256xf32>
    %8 = vector.broadcast %6 : f32 to vector<1x256xf32>
    %9 = arith.mulf %8, %7 : vector<1x256xf32>
    %10 = arith.addf %5, %9 : vector<1x256xf32>
    %c0_5 = arith.constant 0 : index
    %c2 = arith.constant 2 : index
    %11 = memref.load %arg3[%c0_5, %c2] : memref<8x4xf32, #tpu.memory_space<smem>>
    %12 = vector.extract_strided_slice %1 {offsets = [2, 0], sizes = [1, 256], strides = [1, 1]} : vector<4x256xf32> to vector<1x256xf32>
    %13 = vector.broadcast %11 : f32 to vector<1x256xf32>
    %14 = arith.mulf %13, %12 : vector<1x256xf32>
    %15 = arith.addf %10, %14 : vector<1x256xf32>
    %c0_6 = arith.constant 0 : index
    %c3 = arith.constant 3 : index
    %16 = memref.load %arg3[%c0_6, %c3] : memref<8x4xf32, #tpu.memory_space<smem>>
    %17 = vector.extract_strided_slice %1 {offsets = [3, 0], sizes = [1, 256], strides = [1, 1]} : vector<4x256xf32> to vector<1x256xf32>
    %18 = vector.broadcast %16 : f32 to vector<1x256xf32>
    %19 = arith.mulf %18, %17 : vector<1x256xf32>
    %20 = arith.addf %15, %19 : vector<1x256xf32>
    %c1_7 = arith.constant 1 : index
    %c0_8 = arith.constant 0 : index
    %21 = memref.load %arg3[%c1_7, %c0_8] : memref<8x4xf32, #tpu.memory_space<smem>>
    %22 = vector.extract_strided_slice %1 {offsets = [0, 0], sizes = [1, 256], strides = [1, 1]} : vector<4x256xf32> to vector<1x256xf32>
    %23 = vector.broadcast %21 : f32 to vector<1x256xf32>
    %24 = arith.mulf %23, %22 : vector<1x256xf32>
    %c1_9 = arith.constant 1 : index
    %c1_10 = arith.constant 1 : index
    %25 = memref.load %arg3[%c1_9, %c1_10] : memref<8x4xf32, #tpu.memory_space<smem>>
    %26 = vector.extract_strided_slice %1 {offsets = [1, 0], sizes = [1, 256], strides = [1, 1]} : vector<4x256xf32> to vector<1x256xf32>
    %27 = vector.broadcast %25 : f32 to vector<1x256xf32>
    %28 = arith.mulf %27, %26 : vector<1x256xf32>
    %29 = arith.addf %24, %28 : vector<1x256xf32>
    %c1_11 = arith.constant 1 : index
    %c2_12 = arith.constant 2 : index
    %30 = memref.load %arg3[%c1_11, %c2_12] : memref<8x4xf32, #tpu.memory_space<smem>>
    %31 = vector.extract_strided_slice %1 {offsets = [2, 0], sizes = [1, 256], strides = [1, 1]} : vector<4x256xf32> to vector<1x256xf32>
    %32 = vector.broadcast %30 : f32 to vector<1x256xf32>
    %33 = arith.mulf %32, %31 : vector<1x256xf32>
    %34 = arith.addf %29, %33 : vector<1x256xf32>
    %c1_13 = arith.constant 1 : index
    %c3_14 = arith.constant 3 : index
    %35 = memref.load %arg3[%c1_13, %c3_14] : memref<8x4xf32, #tpu.memory_space<smem>>
    %36 = vector.extract_strided_slice %1 {offsets = [3, 0], sizes = [1, 256], strides = [1, 1]} : vector<4x256xf32> to vector<1x256xf32>
    %37 = vector.broadcast %35 : f32 to vector<1x256xf32>
    %38 = arith.mulf %37, %36 : vector<1x256xf32>
    %39 = arith.addf %34, %38 : vector<1x256xf32>
    %c2_15 = arith.constant 2 : index
    %c0_16 = arith.constant 0 : index
    %40 = memref.load %arg3[%c2_15, %c0_16] : memref<8x4xf32, #tpu.memory_space<smem>>
    %41 = vector.extract_strided_slice %1 {offsets = [0, 0], sizes = [1, 256], strides = [1, 1]} : vector<4x256xf32> to vector<1x256xf32>
    %42 = vector.broadcast %40 : f32 to vector<1x256xf32>
    %43 = arith.mulf %42, %41 : vector<1x256xf32>
    %c2_17 = arith.constant 2 : index
    %c1_18 = arith.constant 1 : index
    %44 = memref.load %arg3[%c2_17, %c1_18] : memref<8x4xf32, #tpu.memory_space<smem>>
    %45 = vector.extract_strided_slice %1 {offsets = [1, 0], sizes = [1, 256], strides = [1, 1]} : vector<4x256xf32> to vector<1x256xf32>
    %46 = vector.broadcast %44 : f32 to vector<1x256xf32>
    %47 = arith.mulf %46, %45 : vector<1x256xf32>
    %48 = arith.addf %43, %47 : vector<1x256xf32>
    %c2_19 = arith.constant 2 : index
    %c2_20 = arith.constant 2 : index
    %49 = memref.load %arg3[%c2_19, %c2_20] : memref<8x4xf32, #tpu.memory_space<smem>>
    %50 = vector.extract_strided_slice %1 {offsets = [2, 0], sizes = [1, 256], strides = [1, 1]} : vector<4x256xf32> to vector<1x256xf32>
    %51 = vector.broadcast %49 : f32 to vector<1x256xf32>
    %52 = arith.mulf %51, %50 : vector<1x256xf32>
    %53 = arith.addf %48, %52 : vector<1x256xf32>
    %c2_21 = arith.constant 2 : index
    %c3_22 = arith.constant 3 : index
    %54 = memref.load %arg3[%c2_21, %c3_22] : memref<8x4xf32, #tpu.memory_space<smem>>
    %55 = vector.extract_strided_slice %1 {offsets = [3, 0], sizes = [1, 256], strides = [1, 1]} : vector<4x256xf32> to vector<1x256xf32>
    %56 = vector.broadcast %54 : f32 to vector<1x256xf32>
    %57 = arith.mulf %56, %55 : vector<1x256xf32>
    %58 = arith.addf %53, %57 : vector<1x256xf32>
    %c3_23 = arith.constant 3 : index
    %c0_24 = arith.constant 0 : index
    %59 = memref.load %arg3[%c3_23, %c0_24] : memref<8x4xf32, #tpu.memory_space<smem>>
    %60 = vector.extract_strided_slice %1 {offsets = [0, 0], sizes = [1, 256], strides = [1, 1]} : vector<4x256xf32> to vector<1x256xf32>
    %61 = vector.broadcast %59 : f32 to vector<1x256xf32>
    %62 = arith.mulf %61, %60 : vector<1x256xf32>
    %c3_25 = arith.constant 3 : index
    %c1_26 = arith.constant 1 : index
    %63 = memref.load %arg3[%c3_25, %c1_26] : memref<8x4xf32, #tpu.memory_space<smem>>
    %64 = vector.extract_strided_slice %1 {offsets = [1, 0], sizes = [1, 256], strides = [1, 1]} : vector<4x256xf32> to vector<1x256xf32>
    %65 = vector.broadcast %63 : f32 to vector<1x256xf32>
    %66 = arith.mulf %65, %64 : vector<1x256xf32>
    %67 = arith.addf %62, %66 : vector<1x256xf32>
    %c3_27 = arith.constant 3 : index
    %c2_28 = arith.constant 2 : index
    %68 = memref.load %arg3[%c3_27, %c2_28] : memref<8x4xf32, #tpu.memory_space<smem>>
    %69 = vector.extract_strided_slice %1 {offsets = [2, 0], sizes = [1, 256], strides = [1, 1]} : vector<4x256xf32> to vector<1x256xf32>
    %70 = vector.broadcast %68 : f32 to vector<1x256xf32>
    %71 = arith.mulf %70, %69 : vector<1x256xf32>
    %72 = arith.addf %67, %71 : vector<1x256xf32>
    %c3_29 = arith.constant 3 : index
    %c3_30 = arith.constant 3 : index
    %73 = memref.load %arg3[%c3_29, %c3_30] : memref<8x4xf32, #tpu.memory_space<smem>>
    %74 = vector.extract_strided_slice %1 {offsets = [3, 0], sizes = [1, 256], strides = [1, 1]} : vector<4x256xf32> to vector<1x256xf32>
    %75 = vector.broadcast %73 : f32 to vector<1x256xf32>
    %76 = arith.mulf %75, %74 : vector<1x256xf32>
    %77 = arith.addf %72, %76 : vector<1x256xf32>
    %c4 = arith.constant 4 : index
    %c0_31 = arith.constant 0 : index
    %78 = memref.load %arg3[%c4, %c0_31] : memref<8x4xf32, #tpu.memory_space<smem>>
    %79 = vector.extract_strided_slice %1 {offsets = [0, 0], sizes = [1, 256], strides = [1, 1]} : vector<4x256xf32> to vector<1x256xf32>
    %80 = vector.broadcast %78 : f32 to vector<1x256xf32>
    %81 = arith.mulf %80, %79 : vector<1x256xf32>
    %c4_32 = arith.constant 4 : index
    %c1_33 = arith.constant 1 : index
    %82 = memref.load %arg3[%c4_32, %c1_33] : memref<8x4xf32, #tpu.memory_space<smem>>
    %83 = vector.extract_strided_slice %1 {offsets = [1, 0], sizes = [1, 256], strides = [1, 1]} : vector<4x256xf32> to vector<1x256xf32>
    %84 = vector.broadcast %82 : f32 to vector<1x256xf32>
    %85 = arith.mulf %84, %83 : vector<1x256xf32>
    %86 = arith.addf %81, %85 : vector<1x256xf32>
    %c4_34 = arith.constant 4 : index
    %c2_35 = arith.constant 2 : index
    %87 = memref.load %arg3[%c4_34, %c2_35] : memref<8x4xf32, #tpu.memory_space<smem>>
    %88 = vector.extract_strided_slice %1 {offsets = [2, 0], sizes = [1, 256], strides = [1, 1]} : vector<4x256xf32> to vector<1x256xf32>
    %89 = vector.broadcast %87 : f32 to vector<1x256xf32>
    %90 = arith.mulf %89, %88 : vector<1x256xf32>
    %91 = arith.addf %86, %90 : vector<1x256xf32>
    %c4_36 = arith.constant 4 : index
    %c3_37 = arith.constant 3 : index
    %92 = memref.load %arg3[%c4_36, %c3_37] : memref<8x4xf32, #tpu.memory_space<smem>>
    %93 = vector.extract_strided_slice %1 {offsets = [3, 0], sizes = [1, 256], strides = [1, 1]} : vector<4x256xf32> to vector<1x256xf32>
    %94 = vector.broadcast %92 : f32 to vector<1x256xf32>
    %95 = arith.mulf %94, %93 : vector<1x256xf32>
    %96 = arith.addf %91, %95 : vector<1x256xf32>
    %c5 = arith.constant 5 : index
    %c0_38 = arith.constant 0 : index
    %97 = memref.load %arg3[%c5, %c0_38] : memref<8x4xf32, #tpu.memory_space<smem>>
    %98 = vector.extract_strided_slice %1 {offsets = [0, 0], sizes = [1, 256], strides = [1, 1]} : vector<4x256xf32> to vector<1x256xf32>
    %99 = vector.broadcast %97 : f32 to vector<1x256xf32>
    %100 = arith.mulf %99, %98 : vector<1x256xf32>
    %c5_39 = arith.constant 5 : index
    %c1_40 = arith.constant 1 : index
    %101 = memref.load %arg3[%c5_39, %c1_40] : memref<8x4xf32, #tpu.memory_space<smem>>
    %102 = vector.extract_strided_slice %1 {offsets = [1, 0], sizes = [1, 256], strides = [1, 1]} : vector<4x256xf32> to vector<1x256xf32>
    %103 = vector.broadcast %101 : f32 to vector<1x256xf32>
    %104 = arith.mulf %103, %102 : vector<1x256xf32>
    %105 = arith.addf %100, %104 : vector<1x256xf32>
    %c5_41 = arith.constant 5 : index
    %c2_42 = arith.constant 2 : index
    %106 = memref.load %arg3[%c5_41, %c2_42] : memref<8x4xf32, #tpu.memory_space<smem>>
    %107 = vector.extract_strided_slice %1 {offsets = [2, 0], sizes = [1, 256], strides = [1, 1]} : vector<4x256xf32> to vector<1x256xf32>
    %108 = vector.broadcast %106 : f32 to vector<1x256xf32>
    %109 = arith.mulf %108, %107 : vector<1x256xf32>
    %110 = arith.addf %105, %109 : vector<1x256xf32>
    %c5_43 = arith.constant 5 : index
    %c3_44 = arith.constant 3 : index
    %111 = memref.load %arg3[%c5_43, %c3_44] : memref<8x4xf32, #tpu.memory_space<smem>>
    %112 = vector.extract_strided_slice %1 {offsets = [3, 0], sizes = [1, 256], strides = [1, 1]} : vector<4x256xf32> to vector<1x256xf32>
    %113 = vector.broadcast %111 : f32 to vector<1x256xf32>
    %114 = arith.mulf %113, %112 : vector<1x256xf32>
    %115 = arith.addf %110, %114 : vector<1x256xf32>
    %c6 = arith.constant 6 : index
    %c0_45 = arith.constant 0 : index
    %116 = memref.load %arg3[%c6, %c0_45] : memref<8x4xf32, #tpu.memory_space<smem>>
    %117 = vector.extract_strided_slice %1 {offsets = [0, 0], sizes = [1, 256], strides = [1, 1]} : vector<4x256xf32> to vector<1x256xf32>
    %118 = vector.broadcast %116 : f32 to vector<1x256xf32>
    %119 = arith.mulf %118, %117 : vector<1x256xf32>
    %c6_46 = arith.constant 6 : index
    %c1_47 = arith.constant 1 : index
    %120 = memref.load %arg3[%c6_46, %c1_47] : memref<8x4xf32, #tpu.memory_space<smem>>
    %121 = vector.extract_strided_slice %1 {offsets = [1, 0], sizes = [1, 256], strides = [1, 1]} : vector<4x256xf32> to vector<1x256xf32>
    %122 = vector.broadcast %120 : f32 to vector<1x256xf32>
    %123 = arith.mulf %122, %121 : vector<1x256xf32>
    %124 = arith.addf %119, %123 : vector<1x256xf32>
    %c6_48 = arith.constant 6 : index
    %c2_49 = arith.constant 2 : index
    %125 = memref.load %arg3[%c6_48, %c2_49] : memref<8x4xf32, #tpu.memory_space<smem>>
    %126 = vector.extract_strided_slice %1 {offsets = [2, 0], sizes = [1, 256], strides = [1, 1]} : vector<4x256xf32> to vector<1x256xf32>
    %127 = vector.broadcast %125 : f32 to vector<1x256xf32>
    %128 = arith.mulf %127, %126 : vector<1x256xf32>
    %129 = arith.addf %124, %128 : vector<1x256xf32>
    %c6_50 = arith.constant 6 : index
    %c3_51 = arith.constant 3 : index
    %130 = memref.load %arg3[%c6_50, %c3_51] : memref<8x4xf32, #tpu.memory_space<smem>>
    %131 = vector.extract_strided_slice %1 {offsets = [3, 0], sizes = [1, 256], strides = [1, 1]} : vector<4x256xf32> to vector<1x256xf32>
    %132 = vector.broadcast %130 : f32 to vector<1x256xf32>
    %133 = arith.mulf %132, %131 : vector<1x256xf32>
    %134 = arith.addf %129, %133 : vector<1x256xf32>
    %c7 = arith.constant 7 : index
    %c0_52 = arith.constant 0 : index
    %135 = memref.load %arg3[%c7, %c0_52] : memref<8x4xf32, #tpu.memory_space<smem>>
    %136 = vector.extract_strided_slice %1 {offsets = [0, 0], sizes = [1, 256], strides = [1, 1]} : vector<4x256xf32> to vector<1x256xf32>
    %137 = vector.broadcast %135 : f32 to vector<1x256xf32>
    %138 = arith.mulf %137, %136 : vector<1x256xf32>
    %c7_53 = arith.constant 7 : index
    %c1_54 = arith.constant 1 : index
    %139 = memref.load %arg3[%c7_53, %c1_54] : memref<8x4xf32, #tpu.memory_space<smem>>
    %140 = vector.extract_strided_slice %1 {offsets = [1, 0], sizes = [1, 256], strides = [1, 1]} : vector<4x256xf32> to vector<1x256xf32>
    %141 = vector.broadcast %139 : f32 to vector<1x256xf32>
    %142 = arith.mulf %141, %140 : vector<1x256xf32>
    %143 = arith.addf %138, %142 : vector<1x256xf32>
    %c7_55 = arith.constant 7 : index
    %c2_56 = arith.constant 2 : index
    %144 = memref.load %arg3[%c7_55, %c2_56] : memref<8x4xf32, #tpu.memory_space<smem>>
    %145 = vector.extract_strided_slice %1 {offsets = [2, 0], sizes = [1, 256], strides = [1, 1]} : vector<4x256xf32> to vector<1x256xf32>
    %146 = vector.broadcast %144 : f32 to vector<1x256xf32>
    %147 = arith.mulf %146, %145 : vector<1x256xf32>
    %148 = arith.addf %143, %147 : vector<1x256xf32>
    %c7_57 = arith.constant 7 : index
    %c3_58 = arith.constant 3 : index
    %149 = memref.load %arg3[%c7_57, %c3_58] : memref<8x4xf32, #tpu.memory_space<smem>>
    %150 = vector.extract_strided_slice %1 {offsets = [3, 0], sizes = [1, 256], strides = [1, 1]} : vector<4x256xf32> to vector<1x256xf32>
    %151 = vector.broadcast %149 : f32 to vector<1x256xf32>
    %152 = arith.mulf %151, %150 : vector<1x256xf32>
    %153 = arith.addf %148, %152 : vector<1x256xf32>
    %154 = tpu.concatenate %20, %39, %58, %77, %96, %115, %134, %153 in 0 : vector<1x256xf32>, vector<1x256xf32>, vector<1x256xf32>, vector<1x256xf32>, vector<1x256xf32>, vector<1x256xf32>, vector<1x256xf32>, vector<1x256xf32> -> vector<8x256xf32>
    %c0_59 = arith.constant 0 : index
    %c0_60 = arith.constant 0 : index
    %c0_61 = arith.constant 0 : index
    %155 = vector.load %arg4[%c0_59, %c0_60, %c0_61] : memref<1x8x256xf32, #tpu.memory_space<vmem>>, vector<1x8x256xf32>
    %156 = vector.shape_cast %155 : vector<1x8x256xf32> to vector<8x256xf32>
    %157 = vector.shape_cast %154 : vector<8x256xf32> to vector<1x8x256xf32>
    tpu.vector_store %arg4[%c0_59, %c0_60, %c0_61], %157 {strides = array<i32>} : memref<1x8x256xf32, #tpu.memory_space<vmem>>, vector<1x8x256xf32>,
    return
  }
  func.func @transform_0(%arg0: i32, %arg1: i32) -> (i32, i32, i32) {
    %c0_i32 = arith.constant 0 : i32
    %c0_i32_0 = arith.constant 0 : i32
    return %arg1, %c0_i32, %arg0 : i32, i32, i32
  }
  func.func @transform_1(%arg0: i32, %arg1: i32) -> (i32, i32) {
    %c0_i32 = arith.constant 0 : i32
    %c0_i32_0 = arith.constant 0 : i32
    %c0_i32_1 = arith.constant 0 : i32
    return %c0_i32, %c0_i32_0 : i32, i32
  }
  func.func @transform_2(%arg0: i32, %arg1: i32) -> (i32, i32, i32) {
    %c0_i32 = arith.constant 0 : i32
    %c0_i32_0 = arith.constant 0 : i32
    return %arg1, %c0_i32, %arg0 : i32, i32, i32
  }
}

</mosaic_0001>

<llo_original>
// kernel: conv1x1.1
$region0: #{conv1x1.1}
  #allocation0 [shape = 'u32[]', space=smem, size = 0x4, offset = 0x4, fixed_abs, tag = 'smem constant byte address 0x4 - core index']
  #allocation1 [shape = 'u32[72,128]{1,0:T(1,128)}', space=vmem, size = 0x9000, scoped, tag = 'internal scratch']
  %s0 = inlined_call_operand.vmem [shape: f32[2,4,256], index: 0, kind: input, shape index: {}]
  %s1 = inlined_call_operand.vmem [shape: f32[8,4], index: 1, kind: input, shape index: {}]
  %s2 = inlined_call_operand.vmem [shape: f32[2,8,256], index: 2, kind: output, shape index: {}]
  %s3 = sld [smem:[#allocation0]]
  $region45: #{conv1x1.1} parent=0
    _
  %s5 = ssub.s32 1, %s3
  %s6 = scalar_select 0, %s5, %s3
  $region1: #{conv1x1.1} parent=0
    #allocation2 [shape = 'u8[4096]{0}', space=smem, size = 0x1000, scoped, tag = 'input window, operand 1, single buffered']
    #allocation3 [shape = 's32[2]{0}', space=sflag, size = 0x8, scoped, tag = 'scoped memory for conv1x1.1']
    %7 = vsyncpa [#allocation3], 0
    loop: start=0, step=1, limit=4
    $region2: #{conv1x1.1} parent=1 // loop_pre_header
      _
    $region3: #{conv1x1.1} parent=1 // loop_header
      %s9 = sphi 0, %s13
      %p10 = scmp.ge.s32.totalorder %s9, 4
      %s16 = sphi 0, %s28
      %s17 = sphi 0, %s24
      %s18 = sphi 0, %s16
      %s19 = sphi 0, %s17
      %s20 = sphi 0, %s18
      %s21 = sphi 0, %s19
      %s33 = sphi 0, %s35
      %s36 = sphi 0, %s33
      %s37 = sphi 0, %s36
      %s53 = sphi 0, %s37
      %s57 = sphi 0, %s57
      %s59 = sphi 0, %s57
      %s60 = sphi 0, %s59
      %s74 = sphi 0, %s60
      %s82 = sphi 0, %s84
      %s85 = sphi 0, %s82
      %s86 = sphi 0, %s85
      %s102 = sphi 0, %s86
    $region4: #{conv1x1.1} parent=1 // loop_header_branch
      %12 = sbr.rel (%p10) target = $region8
    $region5: #{conv1x1.1} parent=1 // loop_body
      %s14 = ssub.s32 %s9, 1
      %s15 = ssub.s32 %s9, 2
      %s22 = sadd.s32 1, %s17
      %p23 = scmp.ge.s32.totalorder %s22, 2
      %s24 = scalar_select %p23, 0, %s22
      %s25 = sadd.s32 1, %s16
      %s26 = scalar_select %p23, %s25, %s16
      %p27 = scmp.ge.s32.totalorder %s26, 1
      %s28 = scalar_select %p27, 0, %s26
      %s29 = ssub.s32 %s17, %s24
      %s30 = ssub.s32 %s16, %s28
      %s31 = sor.u32 %s29, %s30
      %p32 = scmp.eq.s32.totalorder %s31, 0
      %s34 = sadd.s32 %s33, 1
      %s35 = scalar_select %p32, %s33, %s34
      %p38 = pneg %p32
      %p39 = scmp.eq.s32.totalorder %s9, 1
      %p40 = por %p38, %p39
      %p41 = scmp.ne.s32.totalorder %s33, %s36
      %p42 = scmp.eq.s32.totalorder %s9, 0
      %p43 = por %p41, %p42
      %p44 = scmp.ne.s32.totalorder %s33, %s36
      %p45 = scmp.eq.s32.totalorder %s14, 1
      %p46 = por %p44, %p45
      %p47 = scmp.ne.s32.totalorder %s36, %s37
      %p48 = scmp.eq.s32.totalorder %s14, 0
      %p49 = por %p47, %p48
      %p50 = scmp.ne.s32.totalorder %s36, %s37
      %p51 = scmp.eq.s32.totalorder %s15, 1
      %p52 = por %p50, %p51
      %p54 = scmp.ne.s32.totalorder %s37, %s53
      %p55 = scmp.eq.s32.totalorder %s15, 0
      %p56 = por %p54, %p55
      %s58 = sadd.s32 %s57, 1
      %p61 = scmp.eq.s32.totalorder %s9, 1
      %p62 = scmp.ne.s32.totalorder %s57, %s59
      %p63 = scmp.eq.s32.totalorder %s9, 0
      %p64 = por %p62, %p63
      %p65 = scmp.ne.s32.totalorder %s57, %s59
      %p66 = scmp.eq.s32.totalorder %s14, 1
      %p67 = por %p65, %p66
      %p68 = scmp.ne.s32.totalorder %s59, %s60
      %p69 = scmp.eq.s32.totalorder %s14, 0
      %p70 = por %p68, %p69
      %p71 = scmp.ne.s32.totalorder %s59, %s60
      %p72 = scmp.eq.s32.totalorder %s15, 1
      %p73 = por %p71, %p72
      %p75 = scmp.ne.s32.totalorder %s60, %s74
      %p76 = scmp.eq.s32.totalorder %s15, 0
      %p77 = por %p75, %p76
      %s78 = ssub.s32 %s17, %s24
      %s79 = ssub.s32 %s16, %s28
      %s80 = sor.u32 %s78, %s79
      %p81 = scmp.eq.s32.totalorder %s80, 0
      %s83 = sadd.s32 %s82, 1
      %s84 = scalar_select %p81, %s82, %s83
      %p87 = pneg %p81
      %p88 = scmp.eq.s32.totalorder %s9, 1
      %p89 = por %p87, %p88
      %p90 = scmp.ne.s32.totalorder %s82, %s85
      %p91 = scmp.eq.s32.totalorder %s9, 0
      %p92 = por %p90, %p91
      %p93 = scmp.ne.s32.totalorder %s82, %s85
      %p94 = scmp.eq.s32.totalorder %s14, 1
      %p95 = por %p93, %p94
      %p96 = scmp.ne.s32.totalorder %s85, %s86
      %p97 = scmp.eq.s32.totalorder %s14, 0
      %p98 = por %p96, %p97
      %p99 = scmp.ne.s32.totalorder %s85, %s86
      %p100 = scmp.eq.s32.totalorder %s15, 1
      %p101 = por %p99, %p100
      %p103 = scmp.ne.s32.totalorder %s86, %s102
      %p104 = scmp.eq.s32.totalorder %s15, 0
      %p105 = por %p103, %p104
      %p106 = scmp.le.s32.totalorder 1, %s9
      %p107 = scmp.lt.s32.totalorder %s9, 3
      %p108 = pnand %p106, %p107
      %p109 = pneg %p108
      // Predicated region
      $region9: #{conv1x1.1} parent=5 // pred_check
        _
      $region10: #{conv1x1.1} parent=5 // pred_check_branch
        %111 = sbr.rel (%p108) target = $region12
      $region11: #{conv1x1.1} parent=5 // pred_region
        %s112 = ssub.s32 %s9, 1
        // Predicated region
        $region13: #{conv1x1.1} parent=11 // pred_check
          %p113 = pneg %p70
        $region14: #{conv1x1.1} parent=11 // pred_check_branch
          %115 = sbr.rel (%p113) target = $region16
        $region15: #{conv1x1.1} parent=11 // pred_region
          %117 = vsyncadd [#allocation3], 0
          %s119 = sshll.u32 %s1, 4
          %s120 = int_to_ptr.vmem [resolvable:$true] %s119
          %122 = dma.vmem_to_smem %s120, 128, [#allocation2], [#allocation3]
        $region16: #{conv1x1.1} parent=11 // pred_fallthru
          _
      $region12: #{conv1x1.1} parent=5 // pred_fallthru
        _
      %p123 = scmp.lt.s32.totalorder %s9, 2
      // Predicated region
      $region17: #{conv1x1.1} parent=5 // pred_check
        %p124 = pneg %p123
      $region18: #{conv1x1.1} parent=5 // pred_check_branch
        %126 = sbr.rel (%p124) target = $region20
      $region19: #{conv1x1.1} parent=5 // pred_region
        // Predicated region
        $region21: #{conv1x1.1} parent=19 // pred_check
          %p127 = pneg %p43
        $region22: #{conv1x1.1} parent=19 // pred_check_branch
          %129 = sbr.rel (%p127) target = $region24
        $region23: #{conv1x1.1} parent=19 // pred_region
          %s130 = smul.u32 2, %s16
          %p131 = scmp.lt.s32.totalorder %s17, 1
          %s132 = scalar_select %p131, %s17, 1
          %p133 = scmp.lt.s32.totalorder %s130, 1
          %s134 = scalar_select %p133, %s130, 1
          %s135 = smul.addr %s132, 2
          %s136 = sadd.s32 %s134, %s135
          %s137 = smul.addr %s136, 4
          %s138 = scalar_lea.vmem %s0, %s137
          %s139 = smul.u32 2, %s16
        $region24: #{conv1x1.1} parent=19 // pred_fallthru
          _
      $region20: #{conv1x1.1} parent=5 // pred_fallthru
        _
      %p140 = scmp.le.s32.totalorder 1, %s9
      %p141 = scmp.lt.s32.totalorder %s9, 3
      %p142 = pnand %p140, %p141
      %p143 = pneg %p142
      // Predicated region
      $region25: #{conv1x1.1} parent=5 // pred_check
        _
      $region26: #{conv1x1.1} parent=5 // pred_check_branch
        %145 = sbr.rel (%p142) target = $region28
      $region27: #{conv1x1.1} parent=5 // pred_region
        %s146 = ssub.s32 %s9, 1
        // Predicated region
        $region29: #{conv1x1.1} parent=27 // pred_check
          %p147 = pneg %p70
        $region30: #{conv1x1.1} parent=27 // pred_check_branch
          %149 = sbr.rel (%p147) target = $region32
        $region31: #{conv1x1.1} parent=27 // pred_region
          %151 = dma.done [#allocation3], 128
        $region32: #{conv1x1.1} parent=27 // pred_fallthru
          _
        %152 = sfence
        %s153 = smul.u32 2, %s18
        %p154 = scmp.lt.s32.totalorder %s19, 1
        %s155 = scalar_select %p154, %s19, 1
        %p156 = scmp.lt.s32.totalorder %s153, 1
        %s157 = scalar_select %p156, %s153, 1
        %s158 = smul.addr %s155, 2
        %s159 = sadd.s32 %s157, %s158
        %s160 = smul.addr %s159, 4
        %s161 = scalar_lea.vmem %s0, %s160
        %p162 = pneg %p49
        %p163 = pneg %p46
        %p164 = pneg %p70
        %p165 = pneg %p67
        %p166 = pneg %p98
        %p167 = pneg %p95
        %s168 = smul.u32 2, %s18
        %p169 = scmp.lt.s32.totalorder %s19, 1
        %s170 = scalar_select %p169, %s19, 1
        %p171 = scmp.lt.s32.totalorder %s168, 1
        %s172 = scalar_select %p171, %s168, 1
        %s173 = smul.addr %s170, 2
        %s174 = sadd.s32 %s172, %s173
        %s175 = smul.addr %s174, 8
        %s176 = scalar_lea.vmem %s2, %s175
        %s177 = smul.u32 2, %s18
        %p178 = scmp.lt.s32.totalorder %s19, 1
        %s179 = scalar_select %p178, %s19, 1
        %p180 = scmp.lt.s32.totalorder %s177, 1
        %s181 = scalar_select %p180, %s177, 1
        %s182 = smul.addr %s179, 2
        %s183 = sadd.s32 %s181, %s182
        %s184 = smul.addr %s183, 4
        %s185 = scalar_lea.vmem %s0, %s184
        %s186 = smul.u32 2, %s18
        %s187 = smul.u32 2, %s18
        %p188 = scmp.lt.s32.totalorder %s19, 1
        %s189 = scalar_select %p188, %s19, 1
        %p190 = scmp.lt.s32.totalorder %s187, 1
        %s191 = scalar_select %p190, %s187, 1
        %s192 = smul.addr %s189, 2
        %s193 = sadd.s32 %s191, %s192
        %s194 = smul.addr %s193, 8
        %s195 = scalar_lea.vmem %s2, %s194
        %s196 = smul.u32 2, %s18
        %v197 = vld [vmem:[%s185] sm:$0xff]
        %s198 = sld [smem:[#allocation2]]
        %v199 = vstv %s198
        %v200 = vmul.f32 %v199, %v197
        %s201 = sld [smem:[#allocation2 + $0x1]]
        %v202 = vstv %s201
        %v203 = vmul.f32 %v202, %v197
        %v205 = vrot.slane %v203, 5
        %v206 = vrot.slane %v205, 4
        %v208 = vadd.f32 %v200, %v206
        %s209 = sld [smem:[#allocation2 + $0x2]]
        %v210 = vstv %s209
        %v211 = vmul.f32 %v210, %v197
        %v213 = vrot.slane %v211, 6
        %v214 = vrot.slane %v213, 4
        %v216 = vadd.f32 %v208, %v214
        %s217 = sld [smem:[#allocation2 + $0x3]]
        %v218 = vstv %s217
        %v219 = vmul.f32 %v218, %v197
        %v221 = vrot.slane %v219, 7
        %v222 = vrot.slane %v221, 4
        %v224 = vadd.f32 %v216, %v222
        %s225 = sld [smem:[#allocation2 + $0x80]]
        %v226 = vstv %s225
        %v227 = vmul.f32 %v226, %v197
        %s228 = sld [smem:[#allocation2 + $0x81]]
        %v229 = vstv %s228
        %v230 = vmul.f32 %v229, %v197
        %v232 = vrot.slane %v230, 5
        %v233 = vrot.slane %v232, 4
        %v235 = vadd.f32 %v227, %v233
        %s236 = sld [smem:[#allocation2 + $0x82]]
        %v237 = vstv %s236
        %v238 = vmul.f32 %v237, %v197
        %v240 = vrot.slane %v238, 6
        %v241 = vrot.slane %v240, 4
        %v243 = vadd.f32 %v235, %v241
        %s244 = sld [smem:[#allocation2 + $0x83]]
        %v245 = vstv %s244
        %v246 = vmul.f32 %v245, %v197
        %v248 = vrot.slane %v246, 7
        %v249 = vrot.slane %v248, 4
        %v251 = vadd.f32 %v243, %v249
        %s252 = sld [smem:[#allocation2 + $0x100]]
        %v253 = vstv %s252
        %v254 = vmul.f32 %v253, %v197
        %s255 = sld [smem:[#allocation2 + $0x101]]
        %v256 = vstv %s255
        %v257 = vmul.f32 %v256, %v197
        %v259 = vrot.slane %v257, 5
        %v260 = vrot.slane %v259, 4
        %v262 = vadd.f32 %v254, %v260
        %s263 = sld [smem:[#allocation2 + $0x102]]
        %v264 = vstv %s263
        %v265 = vmul.f32 %v264, %v197
        %v267 = vrot.slane %v265, 6
        %v268 = vrot.slane %v267, 4
        %v270 = vadd.f32 %v262, %v268
        %s271 = sld [smem:[#allocation2 + $0x103]]
        %v272 = vstv %s271
        %v273 = vmul.f32 %v272, %v197
        %v275 = vrot.slane %v273, 7
        %v276 = vrot.slane %v275, 4
        %v278 = vadd.f32 %v270, %v276
        %s279 = sld [smem:[#allocation2 + $0x180]]
        %v280 = vstv %s279
        %v281 = vmul.f32 %v280, %v197
        %s282 = sld [smem:[#allocation2 + $0x181]]
        %v283 = vstv %s282
        %v284 = vmul.f32 %v283, %v197
        %v286 = vrot.slane %v284, 5
        %v287 = vrot.slane %v286, 4
        %v289 = vadd.f32 %v281, %v287
        %s290 = sld [smem:[#allocation2 + $0x182]]
        %v291 = vstv %s290
        %v292 = vmul.f32 %v291, %v197
        %v294 = vrot.slane %v292, 6
        %v295 = vrot.slane %v294, 4
        %v297 = vadd.f32 %v289, %v295
        %s298 = sld [smem:[#allocation2 + $0x183]]
        %v299 = vstv %s298
        %v300 = vmul.f32 %v299, %v197
        %v302 = vrot.slane %v300, 7
        %v303 = vrot.slane %v302, 4
        %v305 = vadd.f32 %v297, %v303
        %s306 = sld [smem:[#allocation2 + $0x200]]
        %v307 = vstv %s306
        %v308 = vmul.f32 %v307, %v197
        %s309 = sld [smem:[#allocation2 + $0x201]]
        %v310 = vstv %s309
        %v311 = vmul.f32 %v310, %v197
        %v313 = vrot.slane %v311, 5
        %v314 = vrot.slane %v313, 4
        %v316 = vadd.f32 %v308, %v314
        %s317 = sld [smem:[#allocation2 + $0x202]]
        %v318 = vstv %s317
        %v319 = vmul.f32 %v318, %v197
        %v321 = vrot.slane %v319, 6
        %v322 = vrot.slane %v321, 4
        %v324 = vadd.f32 %v316, %v322
        %s325 = sld [smem:[#allocation2 + $0x203]]
        %v326 = vstv %s325
        %v327 = vmul.f32 %v326, %v197
        %v329 = vrot.slane %v327, 7
        %v330 = vrot.slane %v329, 4
        %v332 = vadd.f32 %v324, %v330
        %s333 = sld [smem:[#allocation2 + $0x280]]
        %v334 = vstv %s333
        %v335 = vmul.f32 %v334, %v197
        %s336 = sld [smem:[#allocation2 + $0x281]]
        %v337 = vstv %s336
        %v338 = vmul.f32 %v337, %v197
        %v340 = vrot.slane %v338, 5
        %v341 = vrot.slane %v340, 4
        %v343 = vadd.f32 %v335, %v341
        %s344 = sld [smem:[#allocation2 + $0x282]]
        %v345 = vstv %s344
        %v346 = vmul.f32 %v345, %v197
        %v348 = vrot.slane %v346, 6
        %v349 = vrot.slane %v348, 4
        %v351 = vadd.f32 %v343, %v349
        %s352 = sld [smem:[#allocation2 + $0x283]]
        %v353 = vstv %s352
        %v354 = vmul.f32 %v353, %v197
        %v356 = vrot.slane %v354, 7
        %v357 = vrot.slane %v356, 4
        %v359 = vadd.f32 %v351, %v357
        %s360 = sld [smem:[#allocation2 + $0x300]]
        %v361 = vstv %s360
        %v362 = vmul.f32 %v361, %v197
        %s363 = sld [smem:[#allocation2 + $0x301]]
        %v364 = vstv %s363
        %v365 = vmul.f32 %v364, %v197
        %v367 = vrot.slane %v365, 5
        %v368 = vrot.slane %v367, 4
        %v370 = vadd.f32 %v362, %v368
        %s371 = sld [smem:[#allocation2 + $0x302]]
        %v372 = vstv %s371
        %v373 = vmul.f32 %v372, %v197
        %v375 = vrot.slane %v373, 6
        %v376 = vrot.slane %v375, 4
        %v378 = vadd.f32 %v370, %v376
        %s379 = sld [smem:[#allocation2 + $0x303]]
        %v380 = vstv %s379
        %v381 = vmul.f32 %v380, %v197
        %v383 = vrot.slane %v381, 7
        %v384 = vrot.slane %v383, 4
        %v386 = vadd.f32 %v378, %v384
        %s387 = sld [smem:[#allocation2 + $0x380]]
        %v388 = vstv %s387
        %v389 = vmul.f32 %v388, %v197
        %s390 = sld [smem:[#allocation2 + $0x381]]
        %v391 = vstv %s390
        %v392 = vmul.f32 %v391, %v197
        %v394 = vrot.slane %v392, 5
        %v395 = vrot.slane %v394, 4
        %v397 = vadd.f32 %v389, %v395
        %s398 = sld [smem:[#allocation2 + $0x382]]
        %v399 = vstv %s398
        %v400 = vmul.f32 %v399, %v197
        %v402 = vrot.slane %v400, 6
        %v403 = vrot.slane %v402, 4
        %v405 = vadd.f32 %v397, %v403
        %s406 = sld [smem:[#allocation2 + $0x383]]
        %v407 = vstv %s406
        %v408 = vmul.f32 %v407, %v197
        %v410 = vrot.slane %v408, 7
        %v411 = vrot.slane %v410, 4
        %v413 = vadd.f32 %v405, %v411
        %v415 = vperm.slane %v224, 0
        %v416 = vperm.slane %v224, 4
        %v420 = vperm.slane %v251, 0
        %v421 = vperm.slane %v251, 4
        %v425 = vperm.slane %v278, 0
        %v426 = vperm.slane %v278, 4
        %v430 = vperm.slane %v305, 0
        %v431 = vperm.slane %v305, 4
        %v435 = vperm.slane %v332, 0
        %v436 = vperm.slane %v332, 4
        %v440 = vperm.slane %v359, 0
        %v441 = vperm.slane %v359, 4
        %v445 = vperm.slane %v386, 0
        %v446 = vperm.slane %v386, 4
        %v450 = vperm.slane %v413, 0
        %v451 = vperm.slane %v413, 4
        %vm454 = vcmask 1040384
        %v455 = vsel %vm454, %v415, %v420
        %v456 = vsel %vm454, %v416, %v421
        %vm457 = vcmask 1041408
        %v458 = vsel %vm457, %v455, %v425
        %v459 = vsel %vm457, %v456, %v426
        %vm460 = vcmask 1042432
        %v461 = vsel %vm460, %v458, %v430
        %v462 = vsel %vm460, %v459, %v431
        %vm463 = vcmask 1043456
        %v464 = vsel %vm463, %v461, %v435
        %v465 = vsel %vm463, %v462, %v436
        %vm466 = vcmask 1044480
        %v467 = vsel %vm466, %v464, %v440
        %v468 = vsel %vm466, %v465, %v441
        %vm469 = vcmask 1045504
        %v470 = vsel %vm469, %v467, %v445
        %v471 = vsel %vm469, %v468, %v446
        %vm472 = vcmask 1046528
        %v473 = vsel %vm472, %v470, %v450
        %v474 = vsel %vm472, %v471, %v451
        %475 = vst [vmem:[%s195] sm:$0xff] %v473
        %476 = vst [vmem:[%s195 + $0x8] sm:$0xff] %v474
        %s477 = smul.u32 2, %s18
        %p478 = scmp.lt.s32.totalorder %s19, 1
        %s479 = scalar_select %p478, %s19, 1
        %p480 = scmp.lt.s32.totalorder %s477, 1
        %s481 = scalar_select %p480, %s477, 1
        %s482 = smul.addr %s479, 2
        %s483 = sadd.s32 %s481, %s482
        %s484 = smul.addr %s483, 8
        %s485 = scalar_lea.vmem %s2, %s484
        // Predicated region
        $region33: #{conv1x1.1} parent=27 // pred_check
          %p486 = pneg %p95
        $region34: #{conv1x1.1} parent=27 // pred_check_branch
          %488 = sbr.rel (%p486) target = $region36
        $region35: #{conv1x1.1} parent=27 // pred_region
          %s489 = smul.u32 2, %s18
        $region36: #{conv1x1.1} parent=27 // pred_fallthru
          _
      $region28: #{conv1x1.1} parent=5 // pred_fallthru
        _
      %p490 = scmp.le.s32.totalorder 2, %s9
      // Predicated region
      $region37: #{conv1x1.1} parent=5 // pred_check
        %p491 = pneg %p490
      $region38: #{conv1x1.1} parent=5 // pred_check_branch
        %493 = sbr.rel (%p491) target = $region40
      $region39: #{conv1x1.1} parent=5 // pred_region
        %s494 = ssub.s32 %s9, 2
        // Predicated region
        $region41: #{conv1x1.1} parent=39 // pred_check
          %p495 = pneg %p101
        $region42: #{conv1x1.1} parent=39 // pred_check_branch
          %497 = sbr.rel (%p495) target = $region44
        $region43: #{conv1x1.1} parent=39 // pred_region
          %s498 = smul.u32 2, %s20
          %p499 = scmp.lt.s32.totalorder %s21, 1
          %s500 = scalar_select %p499, %s21, 1
          %p501 = scmp.lt.s32.totalorder %s498, 1
          %s502 = scalar_select %p501, %s498, 1
          %s503 = smul.addr %s500, 2
          %s504 = sadd.s32 %s502, %s503
          %s505 = smul.addr %s504, 8
          %s506 = scalar_lea.vmem %s2, %s505
        $region44: #{conv1x1.1} parent=39 // pred_fallthru
          _
      $region40: #{conv1x1.1} parent=5 // pred_fallthru
        _
    $region6: #{conv1x1.1} parent=1 // loop_footer
      %s13 = sadd.s32 1, %s9
    $region7: #{conv1x1.1} parent=1 // loop_footer_branch
      %8 = sbr.rel target = $region3
    $region8: #{conv1x1.1} parent=1 // loop_exit
      _
    %507 = vsyncpa [#allocation3], 1
    %s508 = scalar_lea.sflag [#allocation3], 1
    %509 = vsyncpa %s508, 1

</llo_original>
